<compile_context>
chip_gen: v5e
topology: v5e:2x2
jax: 0.10.0
libtpu: 0.0.40
codegen_flags: <defaults>
</compile_context>

<pallas_src>
import functools

import jax
import jax.numpy as jnp
from jax import lax
from jax.experimental import pallas as pl
from jax.experimental.pallas import tpu as pltpu

GN_EPS = 1e-5  # PyTorch GroupNorm default


def _round_up(x, m):
    return ((x + m - 1) // m) * m


def _vmem_limit_bytes():
    cap = 64 * 1024 * 1024  # conservative default (v7x physical VMEM)
    try:
        cap = int(getattr(pltpu.get_tpu_info(), "vmem_capacity_bytes", cap))
    except Exception:
        pass
    # Leave room for Mosaic internal scratch; never request more than 96 MiB.
    return max(32 * 1024 * 1024, min((cap * 3) // 4, 96 * 1024 * 1024))


# ---------------------------------------------------------------------------
# Fused single-pass kernel: pool -> conv_atten -> GroupNorm -> sigmoid ->
# fold (1 + atten) into the conv weight -> 1x1 conv on the resident slab.
# ---------------------------------------------------------------------------
def _fused_kernel(x_ref, wa_ref, gamma_ref, beta_ref, onehot_ref, onehot_t_ref,
                  wc_ref, out_ref, *, inv_hw: float, inv_gsize: float):
    # x_ref:     (1, Cin, HW)   one whole batch slab, native dtype
    # wa_ref:    (Cin, Cin)     conv_atten weight, transposed (in -> out), f32
    # gamma/beta:(1, Cin)       GroupNorm affine, f32
    # onehot:    (Cin, G)       channel -> group one-hot, f32
    # onehot_t:  (G, Cin)       its transpose, f32
    # wc_ref:    (Cout_p, Cin)  conv weight (out, in), f32
    # out_ref:   (1, Cout_p, HW)
    x = x_ref[0]                                                    # (Cin, HW)

    # Global average pool in row layout (1, Cin): ones-row matmul contracting
    # the HW (lane) axis of both operands (the standard A @ B.T pattern).
    ones_row = jnp.ones((1, x.shape[1]), dtype=x.dtype)
    pooled = lax.dot_general(
        ones_row, x, (((1,), (1,)), ((), ())),
        preferred_element_type=jnp.float32) * inv_hw                # (1, Cin)

    # 1x1 conv_atten (no bias).
    a = jnp.dot(pooled, wa_ref[...], preferred_element_type=jnp.float32)

    # GroupNorm (centered variance) via tiny one-hot matmuls.
    onehot = onehot_ref[...]
    onehot_t = onehot_t_ref[...]
    mean_c = jnp.dot(
        jnp.dot(a, onehot, preferred_element_type=jnp.float32) * inv_gsize,
        onehot_t, preferred_element_type=jnp.float32)               # (1, Cin)
    d = a - mean_c
    var_c = jnp.dot(
        jnp.dot(d * d, onehot, preferred_element_type=jnp.float32) * inv_gsize,
        onehot_t, preferred_element_type=jnp.float32)               # (1, Cin)
    a_n = d * lax.rsqrt(var_c + GN_EPS) * gamma_ref[...] + beta_ref[...]

    # x + x*atten == x*(1+atten): fold the per-input-channel scale into the
    # conv weight with a lane-aligned broadcast multiply (no eye matmul).
    scale = 1.0 + jax.nn.sigmoid(a_n)                               # (1, Cin)
    wcs = (wc_ref[...] * scale).astype(x.dtype)                     # (Cout_p, Cin)

    # 1x1 conv on the already-resident slab: x is read from HBM exactly once.
    out_ref[0] = jnp.dot(wcs, x,
                         preferred_element_type=jnp.float32).astype(out_ref.dtype)


# ---------------------------------------------------------------------------
# Fallback pass-2 kernel: tiled 1x1 conv with the per-batch pre-scaled weight.
# ---------------------------------------------------------------------------
def _matmul_kernel(x_ref, wcs_ref, out_ref):
    # x_ref:   (1, Cin, t_hw)    native dtype
    # wcs_ref: (1, Cout_p, Cin)  per-batch scaled conv weight
    # out_ref: (1, Cout_p, t_hw) lane-dense (t_hw multiple of 128)
    out_ref[0] = jnp.dot(wcs_ref[0], x_ref[0],
                         preferred_element_type=jnp.float32).astype(out_ref.dtype)


def feature_selection_module(x_nchw, w_atten, gn_gamma, gn_beta, w_conv,
                             *, num_groups=32, max_fused_bytes=None):
    """x_nchw: (N, Cin, H, W); w_atten: (Cin, Cin); w_conv: (Cout, Cin)."""
    N, Cin, H, W = x_nchw.shape
    Cout = w_conv.shape[0]
    assert Cin % num_groups == 0, (Cin, num_groups)
    gsize = Cin // num_groups
    HW = H * W
    f32 = jnp.float32
    dtype = x_nchw.dtype
    itemsize = jnp.dtype(dtype).itemsize

    # Sublane-pad Cout only (8 rows f32 / 16 bf16); HW sits on the lane axis so
    # no 128-lane output padding (and no wrapper NCHW<->NHWC transposes).
    sub = max(8, 32 // max(1, itemsize))
    Cout_p = _round_up(Cout, sub)
    wc = w_conv.astype(f32)
    if Cout_p != Cout:
        wc = jnp.pad(wc, ((0, Cout_p - Cout), (0, 0)))

    # Native layout: (N, Cin, HW) is a free reshape of NCHW.
    x_flat = x_nchw.reshape(N, Cin, HW)

    vmem_limit = _vmem_limit_bytes()

    # Small resident constants for the attention branch.
    wa_t = jnp.transpose(w_atten).astype(f32)                # (Cin, Cin) in->out
    gamma = gn_gamma.reshape(1, Cin).astype(f32)
    beta = gn_beta.reshape(1, Cin).astype(f32)
    group_id = jnp.arange(Cin, dtype=jnp.int32) // gsize
    onehot = (group_id[:, None] ==
              jnp.arange(num_groups, dtype=jnp.int32)[None, :]).astype(f32)
    onehot_t = jnp.transpose(onehot)

    # ------------------- fused single-pass path ----------------------------
    # Footprint: double-buffered x + out slabs, f32 matmul intermediate, and
    # (double-buffered) small weights, all under the scoped-VMEM limit.
    fused_bytes = (2 * (Cin + Cout_p) * HW * itemsize
                   + Cout_p * HW * 4
                   + 2 * (2 * Cin * Cin + Cout_p * Cin
                          + 2 * Cin * num_groups + 4 * Cin) * 4)
    fuse_budget = vmem_limit - 4 * 1024 * 1024
    if max_fused_bytes is not None:
        fuse_budget = min(fuse_budget, max_fused_bytes)

    if fused_bytes <= fuse_budget:
        # TODO(synk): on v7x with N == 1 the fused kernel occupies a single
        # TensorCore; split the HW axis across cores with a partial-pool
        # combine if that case matters.
        kernel = functools.partial(_fused_kernel, inv_hw=1.0 / HW,
                                   inv_gsize=1.0 / gsize)
        cost = pl.CostEstimate(
            flops=int(2 * N * HW * Cin * (Cout_p + 1)),
            transcendentals=int(2 * N * Cin),
            bytes_accessed=int(N * (Cin + Cout_p) * HW * itemsize))
        out = pl.pallas_call(
            kernel,
            out_shape=jax.ShapeDtypeStruct((N, Cout_p, HW), dtype),
            grid_spec=pltpu.PrefetchScalarGridSpec(
                num_scalar_prefetch=0,
                grid=(N,),
                in_specs=[
                    pl.BlockSpec((1, Cin, HW), lambda n: (n, 0, 0)),
                    pl.BlockSpec((Cin, Cin), lambda n: (0, 0)),
                    pl.BlockSpec((1, Cin), lambda n: (0, 0)),
                    pl.BlockSpec((1, Cin), lambda n: (0, 0)),
                    pl.BlockSpec((Cin, num_groups), lambda n: (0, 0)),
                    pl.BlockSpec((num_groups, Cin), lambda n: (0, 0)),
                    pl.BlockSpec((Cout_p, Cin), lambda n: (0, 0)),
                ],
                out_specs=pl.BlockSpec((1, Cout_p, HW), lambda n: (n, 0, 0)),
            ),
            compiler_params=pltpu.CompilerParams(
                dimension_semantics=("parallel",),
                vmem_limit_bytes=vmem_limit),
            cost_estimate=cost,
        )(x_flat, wa_t, gamma, beta, onehot, onehot_t, wc)
        return out[:, :Cout, :].reshape(N, Cout, H, W)

    # ------------------- fallback 2-pass path ------------------------------
    # Pool + tiny attention finalize in plain XLA (x read once at full HBM
    # bandwidth; no Cin^2 constants held across a pool hot loop), then a tiled
    # Pallas matmul applies the per-batch pre-scaled weight.
    pooled = jnp.mean(x_flat, axis=2, dtype=f32)                     # (N, Cin)
    a = pooled @ wa_t                                                # (N, Cin)
    ag = a.reshape(N, num_groups, gsize)
    mean = jnp.mean(ag, axis=2, keepdims=True)
    var = jnp.mean((ag - mean) ** 2, axis=2, keepdims=True)
    a_n = ((ag - mean) * lax.rsqrt(var + GN_EPS)).reshape(N, Cin)
    a_n = a_n * gamma + beta
    scale = 1.0 + jax.nn.sigmoid(a_n)                                # (N, Cin)
    # TODO(synk): optionally cast f32 activations / wcs to bfloat16 here
    # (halves HBM traffic, f32 accumulation retained) once a bf16 tolerance
    # budget is agreed.
    wcs = (wc[None, :, :] * scale[:, None, :]).astype(dtype)         # (N,Cout_p,Cin)

    # HW tile: largest multiple of 128 fitting a ~16 MiB budget with a
    # triple-buffered x stream and double-buffered output tile.
    budget = min(16 * 1024 * 1024, vmem_limit // 3)
    col_bytes = (3 * Cin + 2 * Cout_p) * itemsize
    t_hw = max(128, min(4096, (budget // col_bytes) // 128 * 128))
    if t_hw >= HW:
        t_hw = _round_up(HW, 128)
    HW_pad = _round_up(HW, t_hw)
    n_t = HW_pad // t_hw
    x_p = x_flat if HW_pad == HW else jnp.pad(
        x_flat, ((0, 0), (0, 0), (0, HW_pad - HW)))

    x_spec = pl.BlockSpec((1, Cin, t_hw), lambda n, t: (n, 0, t))
    if n_t >= 3:
        try:   # deeper pipelining on the streamed x tiles (sweep 2 vs 3)
            x_spec = pl.BlockSpec((1, Cin, t_hw), lambda n, t: (n, 0, t),
                                  pipeline_mode=pl.Buffered(3))
        except TypeError:
            pass

    cost = pl.CostEstimate(
        flops=int(2 * N * HW_pad * Cin * Cout_p),
        transcendentals=0,
        bytes_accessed=int(N * (Cin + Cout_p) * HW_pad * itemsize
                           + N * Cout_p * Cin * itemsize))
    out = pl.pallas_call(
        _matmul_kernel,
        out_shape=jax.ShapeDtypeStruct((N, Cout_p, HW_pad), dtype),
        grid_spec=pltpu.PrefetchScalarGridSpec(
            num_scalar_prefetch=0,
            grid=(N, n_t),
            in_specs=[
                x_spec,
                pl.BlockSpec((1, Cout_p, Cin), lambda n, t: (n, 0, 0)),
            ],
            out_specs=pl.BlockSpec((1, Cout_p, t_hw), lambda n, t: (n, 0, t)),
        ),
        compiler_params=pltpu.CompilerParams(
            dimension_semantics=("parallel", "parallel"),
            vmem_limit_bytes=vmem_limit),
        cost_estimate=cost,
    )(x_p, wcs)
    return out[:, :Cout, :HW].reshape(N, Cout, H, W)


def _reference(x, w_atten, gamma, beta, w_conv, *, num_groups=32):
    """Pure-JAX reference mirroring the PyTorch forward (NCHW)."""
    N, Cin, H, W = x.shape
    pooled = jnp.mean(x, axis=(2, 3), keepdims=True)                 # (N,Cin,1,1)
    a = jnp.einsum('oc,nchw->nohw', w_atten, pooled)                 # 1x1 conv
    ag = a.reshape(N, num_groups, Cin // num_groups)
    mean = jnp.mean(ag, axis=2, keepdims=True)
    var = jnp.mean((ag - mean) ** 2, axis=2, keepdims=True)
    an = ((ag - mean) / jnp.sqrt(var + GN_EPS)).reshape(N, Cin, 1, 1)
    an = an * gamma.reshape(1, Cin, 1, 1) + beta.reshape(1, Cin, 1, 1)
    atten = jax.nn.sigmoid(an)
    x2 = x * (1.0 + atten)
    return jnp.einsum('oc,nchw->nohw', w_conv, x2)


if __name__ == "__main__":
    # Small but GN-compatible shapes (detectron2 GN uses 32 groups).
    N, Cin, Cout, H, W = 2, 64, 32, 16, 16
    num_groups = 32

    key = jax.random.PRNGKey(0)
    kx, kwa, kwc, kg, kb = jax.random.split(key, 5)

    x = jax.random.normal(kx, (N, Cin, H, W), dtype=jnp.float32)
    # conv weights are (out, in, 1, 1) in PyTorch; stored squeezed here.
    w_atten = jax.random.normal(kwa, (Cin, Cin), dtype=jnp.float32) * 0.1
    w_conv = jax.random.normal(kwc, (Cout, Cin), dtype=jnp.float32) * 0.1
    gn_gamma = 1.0 + 0.1 * jax.random.normal(kg, (Cin,), dtype=jnp.float32)
    gn_beta = 0.1 * jax.random.normal(kb, (Cin,), dtype=jnp.float32)

    ref = jax.block_until_ready(
        _reference(x, w_atten, gn_gamma, gn_beta, w_conv, num_groups=num_groups))

    # 1) Fused single-pass path (per-batch slab fits VMEM).
    out = jax.block_until_ready(feature_selection_module(
        x, w_atten, gn_gamma, gn_beta, w_conv, num_groups=num_groups))
    assert out.shape == (N, Cout, H, W), out.shape
    assert jnp.allclose(out, ref, rtol=1e-3, atol=1e-3), float(
        jnp.max(jnp.abs(out - ref)))

    # 2) Fallback 2-pass path (forced by zeroing the fusion budget).
    out2 = jax.block_until_ready(feature_selection_module(
        x, w_atten, gn_gamma, gn_beta, w_conv, num_groups=num_groups,
        max_fused_bytes=0))
    assert jnp.allclose(out2, ref, rtol=1e-3, atol=1e-3), float(
        jnp.max(jnp.abs(out2 - ref)))

    # 3) bf16 activations through the fused path (looser tolerance).
    x16 = x.astype(jnp.bfloat16)
    ref16 = _reference(x16.astype(jnp.float32), w_atten, gn_gamma, gn_beta,
                       w_conv, num_groups=num_groups)
    out16 = jax.block_until_ready(feature_selection_module(
        x16, w_atten, gn_gamma, gn_beta, w_conv, num_groups=num_groups))
    assert jnp.allclose(out16.astype(jnp.float32), ref16,
                        rtol=5e-2, atol=5e-2), float(
        jnp.max(jnp.abs(out16.astype(jnp.float32) - ref16)))

    print("KERNEL_OK")
</pallas_src>

<mosaic_0001>
module attributes {stable_mosaic.version = 11 : i64} {
  func.func @_fused_kernel(%arg0: i32, %arg1: memref<1x64x256xf32, #tpu.memory_space<vmem>>, %arg2: memref<64x64xf32, #tpu.memory_space<vmem>>, %arg3: memref<1x64xf32, #tpu.memory_space<vmem>>, %arg4: memref<1x64xf32, #tpu.memory_space<vmem>>, %arg5: memref<64x32xf32, #tpu.memory_space<vmem>>, %arg6: memref<32x64xf32, #tpu.memory_space<vmem>>, %arg7: memref<32x64xf32, #tpu.memory_space<vmem>>, %arg8: memref<1x32x256xf32, #tpu.memory_space<vmem>>) attributes {dimension_semantics = [#tpu.dimension_semantics<parallel>], iteration_bounds = array<i64: 2>, scalar_prefetch = 0 : i64, scratch_operands = 0 : i64, tpu.core_type = #tpu.core_type<tc>, window_params = [{transform_indices = @transform_0, window_bounds = array<i64: 1, 64, 256>}, {pipeline_mode = #tpu.pipeline_mode<synchronous>, transform_indices = @transform_1, window_bounds = array<i64: 64, 64>}, {pipeline_mode = #tpu.pipeline_mode<synchronous>, transform_indices = @transform_2, window_bounds = array<i64: 1, 64>}, {pipeline_mode = #tpu.pipeline_mode<synchronous>, transform_indices = @transform_3, window_bounds = array<i64: 1, 64>}, {pipeline_mode = #tpu.pipeline_mode<synchronous>, transform_indices = @transform_4, window_bounds = array<i64: 64, 32>}, {pipeline_mode = #tpu.pipeline_mode<synchronous>, transform_indices = @transform_5, window_bounds = array<i64: 32, 64>}, {pipeline_mode = #tpu.pipeline_mode<synchronous>, transform_indices = @transform_6, window_bounds = array<i64: 32, 64>}, {transform_indices = @transform_7, window_bounds = array<i64: 1, 32, 256>}]} {
    %c0 = arith.constant 0 : index
    %c0_0 = arith.constant 0 : index
    %c0_1 = arith.constant 0 : index
    %0 = vector.load %arg1[%c0, %c0_0, %c0_1] : memref<1x64x256xf32, #tpu.memory_space<vmem>>, vector<1x64x256xf32>
    %1 = vector.shape_cast %0 : vector<1x64x256xf32> to vector<64x256xf32>
    %cst = arith.constant 1.000000e+00 : f32
    %2 = vector.broadcast %cst : f32 to vector<1x256xf32>
    %cst_2 = arith.constant dense<0.000000e+00> : vector<1x64xf32>
    %3 = tpu.matmul %2, %1, %cst_2 {dimension_numbers = #tpu.dot_dimension_numbers<[1], [1], [0], [0], [0, 0, 1, 0], [], []>} : vector<1x256xf32>, vector<64x256xf32>, vector<1x64xf32> -> vector<1x64xf32>
    %cst_3 = arith.constant 3.906250e-03 : f32
    %4 = vector.broadcast %cst_3 : f32 to vector<1x64xf32>
    %5 = arith.mulf %3, %4 : vector<1x64xf32>
    %c0_4 = arith.constant 0 : index
    %c0_5 = arith.constant 0 : index
    %6 = vector.load %arg2[%c0_4, %c0_5] : memref<64x64xf32, #tpu.memory_space<vmem>>, vector<64x64xf32>
    %cst_6 = arith.constant dense<0.000000e+00> : vector<1x64xf32>
    %7 = tpu.matmul %5, %6, %cst_6 {dimension_numbers = #tpu.dot_dimension_numbers<[1], [0], [0], [1], [0, 0, 1, 1], [], []>} : vector<1x64xf32>, vector<64x64xf32>, vector<1x64xf32> -> vector<1x64xf32>
    %c0_7 = arith.constant 0 : index
    %c0_8 = arith.constant 0 : index
    %8 = vector.load %arg5[%c0_7, %c0_8] : memref<64x32xf32, #tpu.memory_space<vmem>>, vector<64x32xf32>
    %c0_9 = arith.constant 0 : index
    %c0_10 = arith.constant 0 : index
    %9 = vector.load %arg6[%c0_9, %c0_10] : memref<32x64xf32, #tpu.memory_space<vmem>>, vector<32x64xf32>
    %cst_11 = arith.constant dense<0.000000e+00> : vector<1x32xf32>
    %10 = tpu.matmul %7, %8, %cst_11 {dimension_numbers = #tpu.dot_dimension_numbers<[1], [0], [0], [1], [0, 0, 1, 1], [], []>} : vector<1x64xf32>, vector<64x32xf32>, vector<1x32xf32> -> vector<1x32xf32>
    %cst_12 = arith.constant 5.000000e-01 : f32
    %11 = vector.broadcast %cst_12 : f32 to vector<1x32xf32>
    %12 = arith.mulf %10, %11 : vector<1x32xf32>
    %cst_13 = arith.constant dense<0.000000e+00> : vector<1x64xf32>
    %13 = tpu.matmul %12, %9, %cst_13 {dimension_numbers = #tpu.dot_dimension_numbers<[1], [0], [0], [1], [0, 0, 1, 1], [], []>} : vector<1x32xf32>, vector<32x64xf32>, vector<1x64xf32> -> vector<1x64xf32>
    %14 = arith.subf %7, %13 : vector<1x64xf32>
    %15 = arith.mulf %14, %14 : vector<1x64xf32>
    %cst_14 = arith.constant dense<0.000000e+00> : vector<1x32xf32>
    %16 = tpu.matmul %15, %8, %cst_14 {dimension_numbers = #tpu.dot_dimension_numbers<[1], [0], [0], [1], [0, 0, 1, 1], [], []>} : vector<1x64xf32>, vector<64x32xf32>, vector<1x32xf32> -> vector<1x32xf32>
    %cst_15 = arith.constant 5.000000e-01 : f32
    %17 = vector.broadcast %cst_15 : f32 to vector<1x32xf32>
    %18 = arith.mulf %16, %17 : vector<1x32xf32>
    %cst_16 = arith.constant dense<0.000000e+00> : vector<1x64xf32>
    %19 = tpu.matmul %18, %9, %cst_16 {dimension_numbers = #tpu.dot_dimension_numbers<[1], [0], [0], [1], [0, 0, 1, 1], [], []>} : vector<1x32xf32>, vector<32x64xf32>, vector<1x64xf32> -> vector<1x64xf32>
    %cst_17 = arith.constant 9.99999974E-6 : f32
    %20 = vector.broadcast %cst_17 : f32 to vector<1x64xf32>
    %21 = arith.addf %19, %20 : vector<1x64xf32>
    %22 = math.rsqrt %21 : vector<1x64xf32>
    %23 = arith.mulf %14, %22 : vector<1x64xf32>
    %c0_18 = arith.constant 0 : index
    %c0_19 = arith.constant 0 : index
    %24 = vector.load %arg3[%c0_18, %c0_19] : memref<1x64xf32, #tpu.memory_space<vmem>>, vector<1x64xf32>
    %25 = arith.mulf %23, %24 : vector<1x64xf32>
    %c0_20 = arith.constant 0 : index
    %c0_21 = arith.constant 0 : index
    %26 = vector.load %arg4[%c0_20, %c0_21] : memref<1x64xf32, #tpu.memory_space<vmem>>, vector<1x64xf32>
    %27 = arith.addf %25, %26 : vector<1x64xf32>
    %28 = arith.negf %27 : vector<1x64xf32>
    %29 = math.exp %28 : vector<1x64xf32>
    %cst_22 = arith.constant 1.000000e+00 : f32
    %30 = vector.broadcast %cst_22 : f32 to vector<1x64xf32>
    %31 = arith.addf %30, %29 : vector<1x64xf32>
    %32 = arith.divf %30, %31 : vector<1x64xf32>
    %cst_23 = arith.constant 1.000000e+00 : f32
    %33 = vector.broadcast %cst_23 : f32 to vector<1x64xf32>
    %34 = arith.addf %33, %32 : vector<1x64xf32>
    %c0_24 = arith.constant 0 : index
    %c0_25 = arith.constant 0 : index
    %35 = vector.load %arg7[%c0_24, %c0_25] : memref<32x64xf32, #tpu.memory_space<vmem>>, vector<32x64xf32>
    %36 = vector.broadcast %34 : vector<1x64xf32> to vector<32x64xf32>
    %37 = arith.mulf %35, %36 : vector<32x64xf32>
    %cst_26 = arith.constant dense<0.000000e+00> : vector<32x256xf32>
    %38 = tpu.matmul %37, %1, %cst_26 {dimension_numbers = #tpu.dot_dimension_numbers<[1], [0], [0], [1], [0, 0, 1, 1], [], []>} : vector<32x64xf32>, vector<64x256xf32>, vector<32x256xf32> -> vector<32x256xf32>
    %c0_27 = arith.constant 0 : index
    %c0_28 = arith.constant 0 : index
    %c0_29 = arith.constant 0 : index
    %39 = vector.load %arg8[%c0_27, %c0_28, %c0_29] : memref<1x32x256xf32, #tpu.memory_space<vmem>>, vector<1x32x256xf32>
    %40 = vector.shape_cast %39 : vector<1x32x256xf32> to vector<32x256xf32>
    %41 = vector.shape_cast %38 : vector<32x256xf32> to vector<1x32x256xf32>
    tpu.vector_store %arg8[%c0_27, %c0_28, %c0_29], %41 {strides = array<i32>} : memref<1x32x256xf32, #tpu.memory_space<vmem>>, vector<1x32x256xf32>,
    return
  }
  func.func @transform_0(%arg0: i32) -> (i32, i32, i32) {
    %c0_i32 = arith.constant 0 : i32
    %c0_i32_0 = arith.constant 0 : i32
    %c0_i32_1 = arith.constant 0 : i32
    return %arg0, %c0_i32, %c0_i32_0 : i32, i32, i32
  }
  func.func @transform_1(%arg0: i32) -> (i32, i32) {
    %c0_i32 = arith.constant 0 : i32
    %c0_i32_0 = arith.constant 0 : i32
    %c0_i32_1 = arith.constant 0 : i32
    return %c0_i32, %c0_i32_0 : i32, i32
  }
  func.func @transform_2(%arg0: i32) -> (i32, i32) {
    %c0_i32 = arith.constant 0 : i32
    %c0_i32_0 = arith.constant 0 : i32
    %c0_i32_1 = arith.constant 0 : i32
    return %c0_i32, %c0_i32_0 : i32, i32
  }
  func.func @transform_3(%arg0: i32) -> (i32, i32) {
    %c0_i32 = arith.constant 0 : i32
    %c0_i32_0 = arith.constant 0 : i32
    %c0_i32_1 = arith.constant 0 : i32
    return %c0_i32, %c0_i32_0 : i32, i32
  }
  func.func @transform_4(%arg0: i32) -> (i32, i32) {
    %c0_i32 = arith.constant 0 : i32
    %c0_i32_0 = arith.constant 0 : i32
    %c0_i32_1 = arith.constant 0 : i32
    return %c0_i32, %c0_i32_0 : i32, i32
  }
  func.func @transform_5(%arg0: i32) -> (i32, i32) {
    %c0_i32 = arith.constant 0 : i32
    %c0_i32_0 = arith.constant 0 : i32
    %c0_i32_1 = arith.constant 0 : i32
    return %c0_i32, %c0_i32_0 : i32, i32
  }
  func.func @transform_6(%arg0: i32) -> (i32, i32) {
    %c0_i32 = arith.constant 0 : i32
    %c0_i32_0 = arith.constant 0 : i32
    %c0_i32_1 = arith.constant 0 : i32
    return %c0_i32, %c0_i32_0 : i32, i32
  }
  func.func @transform_7(%arg0: i32) -> (i32, i32, i32) {
    %c0_i32 = arith.constant 0 : i32
    %c0_i32_0 = arith.constant 0 : i32
    %c0_i32_1 = arith.constant 0 : i32
    return %arg0, %c0_i32, %c0_i32_0 : i32, i32, i32
  }
}

</mosaic_0001>

<llo_original>
// kernel: tpu_custom_call.1
$region0: #{tpu_custom_call.1}
  #allocation0 [shape = 'u32[]', space=smem, size = 0x4, offset = 0x4, fixed_abs, tag = 'smem constant byte address 0x4 - core index']
  #allocation1 [shape = 'u32[72,128]{1,0:T(1,128)}', space=vmem, size = 0x9000, scoped, tag = 'internal scratch']
  %s0 = inlined_call_operand.hbm [shape: f32[2,64,256], index: 0, kind: input, shape index: {}]
  %s1 = inlined_call_operand.vmem [shape: f32[64,64], index: 1, kind: input, shape index: {}]
  %s2 = inlined_call_operand.vmem [shape: f32[1,64], index: 2, kind: input, shape index: {}]
  %s3 = inlined_call_operand.hbm [shape: f32[1,64], index: 3, kind: input, shape index: {}]
  %s4 = inlined_call_operand.vmem [shape: f32[64,32], index: 4, kind: input, shape index: {}]
  %s5 = inlined_call_operand.vmem [shape: f32[32,64], index: 5, kind: input, shape index: {}]
  %s6 = inlined_call_operand.hbm [shape: f32[32,64], index: 6, kind: input, shape index: {}]
  %s7 = inlined_call_operand.hbm [shape: f32[2,32,256], index: 7, kind: output, shape index: {}]
  %s8 = sld [smem:[#allocation0]]
  $region73: #{tpu_custom_call.1} parent=0
    _
  %s10 = ssub.s32 1, %s8
  %s11 = scalar_select 0, %s10, %s8
  $region1: #{tpu_custom_call.1} parent=0
    #allocation2 [shape = 'u8[131072]{0}', space=vmem, size = 0x20000, scoped, tag = 'input window, operand 0']
    #allocation3 [shape = 's32[2]{0}', space=sflag, size = 0x8, scoped, tag = 'scoped memory for tpu_custom_call.1']
    #allocation4 [shape = 's32[2]{0}', space=sflag, size = 0x8, scoped, tag = 'scoped memory for tpu_custom_call.1']
    #allocation5 [shape = 'u8[512]{0}', space=vmem, size = 0x400, scoped, tag = 'input window, operand 3, single buffered']
    #allocation6 [shape = 's32[1]{0}', space=sflag, size = 0x4, scoped, tag = 'scoped memory for tpu_custom_call.1']
    #allocation7 [shape = 'u8[16384]{0}', space=vmem, size = 0x4000, scoped, tag = 'input window, operand 6, single buffered']
    #allocation8 [shape = 'u8[65536]{0}', space=vmem, size = 0x10000, scoped, tag = 'output window, operand 0']
    %12 = vsyncpa [#allocation3], 0
    %s13 = scalar_lea.sflag [#allocation3], 1
    %14 = vsyncpa %s13, 0
    %15 = vsyncpa [#allocation6], 0
    %16 = vsyncpa [#allocation4], 0
    %s17 = scalar_lea.sflag [#allocation4], 1
    %18 = vsyncpa %s17, 0
    loop: start=0, step=1, limit=4
    $region2: #{tpu_custom_call.1} parent=1 // loop_pre_header
      _
    $region3: #{tpu_custom_call.1} parent=1 // loop_header
      %s20 = sphi 0, %s24
      %p21 = scmp.ge.s32.totalorder %s20, 4
      %s30 = sphi 0, %s32
      %s33 = sphi 0, %s30
      %s34 = sphi 0, %s33
      %s50 = sphi 0, %s34
      %s54 = sphi 0, %s54
      %s56 = sphi 0, %s54
      %s57 = sphi 0, %s56
      %s71 = sphi 0, %s57
      %s75 = sphi 0, %s75
      %s77 = sphi 0, %s75
      %s78 = sphi 0, %s77
      %s92 = sphi 0, %s78
      %s96 = sphi 0, %s96
      %s98 = sphi 0, %s96
      %s99 = sphi 0, %s98
      %s113 = sphi 0, %s99
      %s117 = sphi 0, %s117
      %s119 = sphi 0, %s117
      %s120 = sphi 0, %s119
      %s134 = sphi 0, %s120
      %s138 = sphi 0, %s138
      %s140 = sphi 0, %s138
      %s141 = sphi 0, %s140
      %s155 = sphi 0, %s141
      %s159 = sphi 0, %s159
      %s161 = sphi 0, %s159
      %s162 = sphi 0, %s161
      %s176 = sphi 0, %s162
      %s182 = sphi 0, %s184
      %s185 = sphi 0, %s182
      %s186 = sphi 0, %s185
      %s202 = sphi 0, %s186
    $region4: #{tpu_custom_call.1} parent=1 // loop_header_branch
      %23 = sbr.rel (%p21) target = $region8
    $region5: #{tpu_custom_call.1} parent=1 // loop_body
      %s25 = ssub.s32 %s20, 1
      %s26 = ssub.s32 %s20, 2
      %s27 = sadd.s32 %s20, 1
      %s28 = ssub.s32 %s20, %s27
      %p29 = scmp.eq.s32.totalorder %s28, 0
      %s31 = sadd.s32 %s30, 1
      %s32 = scalar_select %p29, %s30, %s31
      %p35 = pneg %p29
      %p36 = scmp.eq.s32.totalorder %s20, 1
      %p37 = por %p35, %p36
      %p38 = scmp.ne.s32.totalorder %s30, %s33
      %p39 = scmp.eq.s32.totalorder %s20, 0
      %p40 = por %p38, %p39
      %p41 = scmp.ne.s32.totalorder %s30, %s33
      %p42 = scmp.eq.s32.totalorder %s25, 1
      %p43 = por %p41, %p42
      %p44 = scmp.ne.s32.totalorder %s33, %s34
      %p45 = scmp.eq.s32.totalorder %s25, 0
      %p46 = por %p44, %p45
      %p47 = scmp.ne.s32.totalorder %s33, %s34
      %p48 = scmp.eq.s32.totalorder %s26, 1
      %p49 = por %p47, %p48
      %p51 = scmp.ne.s32.totalorder %s34, %s50
      %p52 = scmp.eq.s32.totalorder %s26, 0
      %p53 = por %p51, %p52
      %s55 = sadd.s32 %s54, 1
      %p58 = scmp.eq.s32.totalorder %s20, 1
      %p59 = scmp.ne.s32.totalorder %s54, %s56
      %p60 = scmp.eq.s32.totalorder %s20, 0
      %p61 = por %p59, %p60
      %p62 = scmp.ne.s32.totalorder %s54, %s56
      %p63 = scmp.eq.s32.totalorder %s25, 1
      %p64 = por %p62, %p63
      %p65 = scmp.ne.s32.totalorder %s56, %s57
      %p66 = scmp.eq.s32.totalorder %s25, 0
      %p67 = por %p65, %p66
      %p68 = scmp.ne.s32.totalorder %s56, %s57
      %p69 = scmp.eq.s32.totalorder %s26, 1
      %p70 = por %p68, %p69
      %p72 = scmp.ne.s32.totalorder %s57, %s71
      %p73 = scmp.eq.s32.totalorder %s26, 0
      %p74 = por %p72, %p73
      %s76 = sadd.s32 %s75, 1
      %p79 = scmp.eq.s32.totalorder %s20, 1
      %p80 = scmp.ne.s32.totalorder %s75, %s77
      %p81 = scmp.eq.s32.totalorder %s20, 0
      %p82 = por %p80, %p81
      %p83 = scmp.ne.s32.totalorder %s75, %s77
      %p84 = scmp.eq.s32.totalorder %s25, 1
      %p85 = por %p83, %p84
      %p86 = scmp.ne.s32.totalorder %s77, %s78
      %p87 = scmp.eq.s32.totalorder %s25, 0
      %p88 = por %p86, %p87
      %p89 = scmp.ne.s32.totalorder %s77, %s78
      %p90 = scmp.eq.s32.totalorder %s26, 1
      %p91 = por %p89, %p90
      %p93 = scmp.ne.s32.totalorder %s78, %s92
      %p94 = scmp.eq.s32.totalorder %s26, 0
      %p95 = por %p93, %p94
      %s97 = sadd.s32 %s96, 1
      %p100 = scmp.eq.s32.totalorder %s20, 1
      %p101 = scmp.ne.s32.totalorder %s96, %s98
      %p102 = scmp.eq.s32.totalorder %s20, 0
      %p103 = por %p101, %p102
      %p104 = scmp.ne.s32.totalorder %s96, %s98
      %p105 = scmp.eq.s32.totalorder %s25, 1
      %p106 = por %p104, %p105
      %p107 = scmp.ne.s32.totalorder %s98, %s99
      %p108 = scmp.eq.s32.totalorder %s25, 0
      %p109 = por %p107, %p108
      %p110 = scmp.ne.s32.totalorder %s98, %s99
      %p111 = scmp.eq.s32.totalorder %s26, 1
      %p112 = por %p110, %p111
      %p114 = scmp.ne.s32.totalorder %s99, %s113
      %p115 = scmp.eq.s32.totalorder %s26, 0
      %p116 = por %p114, %p115
      %s118 = sadd.s32 %s117, 1
      %p121 = scmp.eq.s32.totalorder %s20, 1
      %p122 = scmp.ne.s32.totalorder %s117, %s119
      %p123 = scmp.eq.s32.totalorder %s20, 0
      %p124 = por %p122, %p123
      %p125 = scmp.ne.s32.totalorder %s117, %s119
      %p126 = scmp.eq.s32.totalorder %s25, 1
      %p127 = por %p125, %p126
      %p128 = scmp.ne.s32.totalorder %s119, %s120
      %p129 = scmp.eq.s32.totalorder %s25, 0
      %p130 = por %p128, %p129
      %p131 = scmp.ne.s32.totalorder %s119, %s120
      %p132 = scmp.eq.s32.totalorder %s26, 1
      %p133 = por %p131, %p132
      %p135 = scmp.ne.s32.totalorder %s120, %s134
      %p136 = scmp.eq.s32.totalorder %s26, 0
      %p137 = por %p135, %p136
      %s139 = sadd.s32 %s138, 1
      %p142 = scmp.eq.s32.totalorder %s20, 1
      %p143 = scmp.ne.s32.totalorder %s138, %s140
      %p144 = scmp.eq.s32.totalorder %s20, 0
      %p145 = por %p143, %p144
      %p146 = scmp.ne.s32.totalorder %s138, %s140
      %p147 = scmp.eq.s32.totalorder %s25, 1
      %p148 = por %p146, %p147
      %p149 = scmp.ne.s32.totalorder %s140, %s141
      %p150 = scmp.eq.s32.totalorder %s25, 0
      %p151 = por %p149, %p150
      %p152 = scmp.ne.s32.totalorder %s140, %s141
      %p153 = scmp.eq.s32.totalorder %s26, 1
      %p154 = por %p152, %p153
      %p156 = scmp.ne.s32.totalorder %s141, %s155
      %p157 = scmp.eq.s32.totalorder %s26, 0
      %p158 = por %p156, %p157
      %s160 = sadd.s32 %s159, 1
      %p163 = scmp.eq.s32.totalorder %s20, 1
      %p164 = scmp.ne.s32.totalorder %s159, %s161
      %p165 = scmp.eq.s32.totalorder %s20, 0
      %p166 = por %p164, %p165
      %p167 = scmp.ne.s32.totalorder %s159, %s161
      %p168 = scmp.eq.s32.totalorder %s25, 1
      %p169 = por %p167, %p168
      %p170 = scmp.ne.s32.totalorder %s161, %s162
      %p171 = scmp.eq.s32.totalorder %s25, 0
      %p172 = por %p170, %p171
      %p173 = scmp.ne.s32.totalorder %s161, %s162
      %p174 = scmp.eq.s32.totalorder %s26, 1
      %p175 = por %p173, %p174
      %p177 = scmp.ne.s32.totalorder %s162, %s176
      %p178 = scmp.eq.s32.totalorder %s26, 0
      %p179 = por %p177, %p178
      %s180 = ssub.s32 %s20, %s27
      %p181 = scmp.eq.s32.totalorder %s180, 0
      %s183 = sadd.s32 %s182, 1
      %s184 = scalar_select %p181, %s182, %s183
      %p187 = pneg %p181
      %p188 = scmp.eq.s32.totalorder %s20, 1
      %p189 = por %p187, %p188
      %p190 = scmp.ne.s32.totalorder %s182, %s185
      %p191 = scmp.eq.s32.totalorder %s20, 0
      %p192 = por %p190, %p191
      %p193 = scmp.ne.s32.totalorder %s182, %s185
      %p194 = scmp.eq.s32.totalorder %s25, 1
      %p195 = por %p193, %p194
      %p196 = scmp.ne.s32.totalorder %s185, %s186
      %p197 = scmp.eq.s32.totalorder %s25, 0
      %p198 = por %p196, %p197
      %p199 = scmp.ne.s32.totalorder %s185, %s186
      %p200 = scmp.eq.s32.totalorder %s26, 1
      %p201 = por %p199, %p200
      %p203 = scmp.ne.s32.totalorder %s186, %s202
      %p204 = scmp.eq.s32.totalorder %s26, 0
      %p205 = por %p203, %p204
      %p206 = scmp.le.s32.totalorder 1, %s20
      %p207 = scmp.lt.s32.totalorder %s20, 3
      %p208 = pnand %p206, %p207
      %p209 = pneg %p208
      // Predicated region
      $region9: #{tpu_custom_call.1} parent=5 // pred_check
        _
      $region10: #{tpu_custom_call.1} parent=5 // pred_check_branch
        %211 = sbr.rel (%p208) target = $region12
      $region11: #{tpu_custom_call.1} parent=5 // pred_region
        %s212 = ssub.s32 %s20, 1
        // Predicated region
        $region13: #{tpu_custom_call.1} parent=11 // pred_check
          %p213 = pneg %p67
        $region14: #{tpu_custom_call.1} parent=11 // pred_check_branch
          %215 = sbr.rel (%p213) target = $region16
        $region15: #{tpu_custom_call.1} parent=11 // pred_region
          _
        $region16: #{tpu_custom_call.1} parent=11 // pred_fallthru
          _
        // Predicated region
        $region17: #{tpu_custom_call.1} parent=11 // pred_check
          %p216 = pneg %p88
        $region18: #{tpu_custom_call.1} parent=11 // pred_check_branch
          %218 = sbr.rel (%p216) target = $region20
        $region19: #{tpu_custom_call.1} parent=11 // pred_region
          _
        $region20: #{tpu_custom_call.1} parent=11 // pred_fallthru
          _
        // Predicated region
        $region21: #{tpu_custom_call.1} parent=11 // pred_check
          %p219 = pneg %p109
        $region22: #{tpu_custom_call.1} parent=11 // pred_check_branch
          %221 = sbr.rel (%p219) target = $region24
        $region23: #{tpu_custom_call.1} parent=11 // pred_region
          %223 = vsyncadd [#allocation6], 0
          %s225 = sshll.u32 %s3, 4
          %s226 = int_to_ptr.hbm [resolvable:$true] %s225
          %s227 = sshll.u32 [#allocation5], 4
          %s228 = int_to_ptr.vmem [resolvable:$true] %s227
          %230 = dma.hbm_to_vmem [thread:$0]  %s226, 16, %s228, [#allocation6]
        $region24: #{tpu_custom_call.1} parent=11 // pred_fallthru
          _
        // Predicated region
        $region25: #{tpu_custom_call.1} parent=11 // pred_check
          %p231 = pneg %p130
        $region26: #{tpu_custom_call.1} parent=11 // pred_check_branch
          %233 = sbr.rel (%p231) target = $region28
        $region27: #{tpu_custom_call.1} parent=11 // pred_region
          _
        $region28: #{tpu_custom_call.1} parent=11 // pred_fallthru
          _
        // Predicated region
        $region29: #{tpu_custom_call.1} parent=11 // pred_check
          %p234 = pneg %p151
        $region30: #{tpu_custom_call.1} parent=11 // pred_check_branch
          %236 = sbr.rel (%p234) target = $region32
        $region31: #{tpu_custom_call.1} parent=11 // pred_region
          _
        $region32: #{tpu_custom_call.1} parent=11 // pred_fallthru
          _
        // Predicated region
        $region33: #{tpu_custom_call.1} parent=11 // pred_check
          %p237 = pneg %p172
        $region34: #{tpu_custom_call.1} parent=11 // pred_check_branch
          %239 = sbr.rel (%p237) target = $region36
        $region35: #{tpu_custom_call.1} parent=11 // pred_region
          %241 = vsyncadd [#allocation6], 0
          %s242 = sshll.u32 %s6, 4
          %s243 = int_to_ptr.hbm [resolvable:$true] %s242
          %s244 = sshll.u32 [#allocation7], 4
          %s245 = int_to_ptr.vmem [resolvable:$true] %s244
          %250 = dma.hbm_to_vmem [thread:$0]  %s243, 512, %s245, [#allocation6], 128, 128, 8
        $region36: #{tpu_custom_call.1} parent=11 // pred_fallthru
          _
      $region12: #{tpu_custom_call.1} parent=5 // pred_fallthru
        _
      %p251 = scmp.lt.s32.totalorder %s20, 2
      // Predicated region
      $region37: #{tpu_custom_call.1} parent=5 // pred_check
        %p252 = pneg %p251
      $region38: #{tpu_custom_call.1} parent=5 // pred_check_branch
        %254 = sbr.rel (%p252) target = $region40
      $region39: #{tpu_custom_call.1} parent=5 // pred_region
        // Predicated region
        $region41: #{tpu_custom_call.1} parent=39 // pred_check
          %p255 = pneg %p40
        $region42: #{tpu_custom_call.1} parent=39 // pred_check_branch
          %257 = sbr.rel (%p255) target = $region44
        $region43: #{tpu_custom_call.1} parent=39 // pred_region
          %s258 = sand.u32 %s30, 1
          %s259 = scalar_lea.sflag [#allocation3], %s258
          %s260 = sand.u32 %s30, 1
          %s261 = smul.addr %s260, 128
          %s262 = scalar_lea.vmem [#allocation2], %s261
          %264 = vsyncadd %s259, 0
          %s265 = smul.addr %s20, 16
          %s266 = smul.addr %s265, 8
          %s267 = scalar_lea.hbm %s0, %s266
          %s268 = sshll.u32 %s267, 4
          %s269 = int_to_ptr.hbm [resolvable:$true] %s268
          %s270 = sshll.u32 %s262, 4
          %s271 = int_to_ptr.vmem [resolvable:$true] %s270
          %276 = dma.hbm_to_vmem [thread:$0]  %s269, 2048, %s271, %s259, 256, 256, 16
        $region44: #{tpu_custom_call.1} parent=39 // pred_fallthru
          _
      $region40: #{tpu_custom_call.1} parent=5 // pred_fallthru
        _
      %p277 = scmp.le.s32.totalorder 1, %s20
      %p278 = scmp.lt.s32.totalorder %s20, 3
      %p279 = pnand %p277, %p278
      %p280 = pneg %p279
      // Predicated region
      $region45: #{tpu_custom_call.1} parent=5 // pred_check
        _
      $region46: #{tpu_custom_call.1} parent=5 // pred_check_branch
        %282 = sbr.rel (%p279) target = $region48
      $region47: #{tpu_custom_call.1} parent=5 // pred_region
        %s283 = ssub.s32 %s20, 1
        %s284 = sand.u32 %s33, 1
        %s285 = scalar_lea.sflag [#allocation3], %s284
        %s286 = sand.u32 %s33, 1
        %s287 = smul.addr %s286, 128
        %s288 = scalar_lea.vmem [#allocation2], %s287
        // Predicated region
        $region49: #{tpu_custom_call.1} parent=47 // pred_check
          %p289 = pneg %p46
        $region50: #{tpu_custom_call.1} parent=47 // pred_check_branch
          %291 = sbr.rel (%p289) target = $region52
        $region51: #{tpu_custom_call.1} parent=47 // pred_region
          %293 = dma.done %s285, 2048
        $region52: #{tpu_custom_call.1} parent=47 // pred_fallthru
          _
        // Predicated region
        $region53: #{tpu_custom_call.1} parent=47 // pred_check
          %p294 = pneg %p109
        $region54: #{tpu_custom_call.1} parent=47 // pred_check_branch
          %296 = sbr.rel (%p294) target = $region56
        $region55: #{tpu_custom_call.1} parent=47 // pred_region
          %298 = dma.done [#allocation6], 16
        $region56: #{tpu_custom_call.1} parent=47 // pred_fallthru
          _
        // Predicated region
        $region57: #{tpu_custom_call.1} parent=47 // pred_check
          %p299 = pneg %p172
        $region58: #{tpu_custom_call.1} parent=47 // pred_check_branch
          %301 = sbr.rel (%p299) target = $region60
        $region59: #{tpu_custom_call.1} parent=47 // pred_region
          %303 = dma.done [#allocation6], 512
        $region60: #{tpu_custom_call.1} parent=47 // pred_fallthru
          _
        %s304 = sand.u32 %s33, 1
        %s305 = scalar_lea.sflag [#allocation3], %s304
        %s306 = sand.u32 %s33, 1
        %s307 = smul.addr %s306, 128
        %s308 = scalar_lea.vmem [#allocation2], %s307
        %p309 = pneg %p46
        %p310 = pneg %p43
        %p311 = pneg %p67
        %p312 = pneg %p64
        %p313 = pneg %p88
        %p314 = pneg %p85
        %p315 = pneg %p109
        %p316 = pneg %p106
        %p317 = pneg %p130
        %p318 = pneg %p127
        %p319 = pneg %p151
        %p320 = pneg %p148
        %p321 = pneg %p172
        %p322 = pneg %p169
        %p323 = pneg %p198
        %p324 = pneg %p195
        %s325 = sand.u32 %s185, 1
        %s326 = scalar_lea.sflag [#allocation4], %s325
        %s327 = sand.u32 %s185, 1
        %s328 = smul.addr %s327, 64
        %s329 = scalar_lea.vmem [#allocation8], %s328
        %v330 = vld [vmem:[%s288] sm:$0xff]
        %v331 = vld [vmem:[%s288 + $0x8] sm:$0xff]
        %v332 = vld [vmem:[%s288 + $0x10] sm:$0xff]
        %v333 = vld [vmem:[%s288 + $0x18] sm:$0xff]
        %v334 = vld [vmem:[%s288 + $0x20] sm:$0xff]
        %v335 = vld [vmem:[%s288 + $0x28] sm:$0xff]
        %v336 = vld [vmem:[%s288 + $0x30] sm:$0xff]
        %v337 = vld [vmem:[%s288 + $0x38] sm:$0xff]
        %v338 = vld [vmem:[%s288 + $0x40] sm:$0xff]
        %v339 = vld [vmem:[%s288 + $0x48] sm:$0xff]
        %v340 = vld [vmem:[%s288 + $0x50] sm:$0xff]
        %v341 = vld [vmem:[%s288 + $0x58] sm:$0xff]
        %v342 = vld [vmem:[%s288 + $0x60] sm:$0xff]
        %v343 = vld [vmem:[%s288 + $0x68] sm:$0xff]
        %v344 = vld [vmem:[%s288 + $0x70] sm:$0xff]
        %v345 = vld [vmem:[%s288 + $0x78] sm:$0xff]
        %346 = vmatpush.xpose.msra.mxu0 0.0
        %347 = vmatpush.xpose.msra.mxu0 0.0
        %348 = vmatpush.xpose.msra.mxu0 0.0
        %349 = vmatpush.xpose.msra.mxu0 0.0
        %350 = vmatpush.xpose.msra.mxu0 0.0
        %351 = vmatpush.xpose.msra.mxu0 0.0
        %352 = vmatpush.xpose.msra.mxu0 0.0
        %353 = vmatpush.xpose.msra.mxu0 0.0
        %354 = vmatpush.xpose.msra.mxu0 %v344
        %355 = vmatpush.xpose.msra.mxu0 %v342
        %356 = vmatpush.xpose.msra.mxu0 %v340
        %357 = vmatpush.xpose.msra.mxu0 %v338
        %358 = vmatpush.xpose.msra.mxu0 %v336
        %359 = vmatpush.xpose.msra.mxu0 %v334
        %360 = vmatpush.xpose.msra.mxu0 %v332
        %361 = vmatpush.xpose.msra.mxu0 %v330
        %362 = vmatmul.f32.gmra.mxu0 1.0
        %v363 = vpop.f32.mrf.mxu0
        %v364 = vadd.f32 0.0, %v363
        %365 = vdwg.mxu0
        %366 = vmatpush.xpose.msra.mxu0 0.0
        %367 = vmatpush.xpose.msra.mxu0 0.0
        %368 = vmatpush.xpose.msra.mxu0 0.0
        %369 = vmatpush.xpose.msra.mxu0 0.0
        %370 = vmatpush.xpose.msra.mxu0 0.0
        %371 = vmatpush.xpose.msra.mxu0 0.0
        %372 = vmatpush.xpose.msra.mxu0 0.0
        %373 = vmatpush.xpose.msra.mxu0 0.0
        %374 = vmatpush.xpose.msra.mxu0 %v345
        %375 = vmatpush.xpose.msra.mxu0 %v343
        %376 = vmatpush.xpose.msra.mxu0 %v341
        %377 = vmatpush.xpose.msra.mxu0 %v339
        %378 = vmatpush.xpose.msra.mxu0 %v337
        %379 = vmatpush.xpose.msra.mxu0 %v335
        %380 = vmatpush.xpose.msra.mxu0 %v333
        %381 = vmatpush.xpose.msra.mxu0 %v331
        %382 = vmatmul.f32.gmra.mxu0 1.0
        %v383 = vpop.f32.mrf.mxu0
        %v384 = vadd.f32 %v364, %v383
        %385 = vdwg.mxu0
        %v386 = vmul.f32 %v384, 0.00390625
        %v387 = vld [vmem:[%s1] sm:$0xff]
        %v388 = vld [vmem:[%s1 + $0x8] sm:$0xff]
        %v389 = vld [vmem:[%s1 + $0x10] sm:$0xff]
        %v390 = vld [vmem:[%s1 + $0x18] sm:$0xff]
        %v391 = vld [vmem:[%s1 + $0x20] sm:$0xff]
        %v392 = vld [vmem:[%s1 + $0x28] sm:$0xff]
        %v393 = vld [vmem:[%s1 + $0x30] sm:$0xff]
        %v394 = vld [vmem:[%s1 + $0x38] sm:$0xff]
        %vm395 = vcmask 523264
        %v397 = vsel %vm395, %v386, 0
        %399 = vmatpush.msra.mxu0 0.0
        %400 = vmatpush.msra.mxu0 0.0
        %401 = vmatpush.msra.mxu0 0.0
        %402 = vmatpush.msra.mxu0 0.0
        %403 = vmatpush.msra.mxu0 0.0
        %404 = vmatpush.msra.mxu0 0.0
        %405 = vmatpush.msra.mxu0 0.0
        %406 = vmatpush.msra.mxu0 0.0
        %407 = vmatpush.msra.mxu0 %v394
        %408 = vmatpush.msra.mxu0 %v393
        %409 = vmatpush.msra.mxu0 %v392
        %410 = vmatpush.msra.mxu0 %v391
        %411 = vmatpush.msra.mxu0 %v390
        %412 = vmatpush.msra.mxu0 %v389
        %413 = vmatpush.msra.mxu0 %v388
        %414 = vmatpush.msra.mxu0 %v387
        %415 = vmatmul.f32.gmra.mxu0 %v397
        %v416 = vpop.f32.mrf.mxu0
        %v417 = vadd.f32 0.0, %v416
        %418 = vdwg.mxu0
        %v419 = vld [vmem:[%s4] sm:$0xff]
        %v420 = vld [vmem:[%s4 + $0x8] sm:$0xff]
        %v421 = vld [vmem:[%s4 + $0x10] sm:$0xff]
        %v422 = vld [vmem:[%s4 + $0x18] sm:$0xff]
        %v423 = vld [vmem:[%s4 + $0x20] sm:$0xff]
        %v424 = vld [vmem:[%s4 + $0x28] sm:$0xff]
        %v425 = vld [vmem:[%s4 + $0x30] sm:$0xff]
        %v426 = vld [vmem:[%s4 + $0x38] sm:$0xff]
        %v427 = vld [vmem:[%s5] sm:$0xff]
        %v428 = vld [vmem:[%s5 + $0x8] sm:$0xff]
        %v429 = vld [vmem:[%s5 + $0x10] sm:$0xff]
        %v430 = vld [vmem:[%s5 + $0x18] sm:$0xff]
        %v432 = vsel %vm395, %v417, 0
        %434 = vmatpush.msra.mxu0 0.0
        %435 = vmatpush.msra.mxu0 0.0
        %436 = vmatpush.msra.mxu0 0.0
        %437 = vmatpush.msra.mxu0 0.0
        %438 = vmatpush.msra.mxu0 0.0
        %439 = vmatpush.msra.mxu0 0.0
        %440 = vmatpush.msra.mxu0 0.0
        %441 = vmatpush.msra.mxu0 0.0
        %442 = vmatpush.msra.mxu0 %v426
        %443 = vmatpush.msra.mxu0 %v425
        %444 = vmatpush.msra.mxu0 %v424
        %445 = vmatpush.msra.mxu0 %v423
        %446 = vmatpush.msra.mxu0 %v422
        %447 = vmatpush.msra.mxu0 %v421
        %448 = vmatpush.msra.mxu0 %v420
        %449 = vmatpush.msra.mxu0 %v419
        %450 = vmatmul.f32.gmra.mxu0 %v432
        %v451 = vpop.f32.mrf.mxu0
        %v452 = vadd.f32 0.0, %v451
        %453 = vdwg.mxu0
        %v454 = vmul.f32 %v452, 0.5
        %vm455 = vcmask 261120
        %v457 = vsel %vm455, %v454, 0
        %459 = vmatpush.msra.mxu0 0.0
        %460 = vmatpush.msra.mxu0 0.0
        %461 = vmatpush.msra.mxu0 0.0
        %462 = vmatpush.msra.mxu0 0.0
        %463 = vmatpush.msra.mxu0 0.0
        %464 = vmatpush.msra.mxu0 0.0
        %465 = vmatpush.msra.mxu0 0.0
        %466 = vmatpush.msra.mxu0 0.0
        %467 = vmatpush.msra.mxu0 0.0
        %468 = vmatpush.msra.mxu0 0.0
        %469 = vmatpush.msra.mxu0 0.0
        %470 = vmatpush.msra.mxu0 0.0
        %471 = vmatpush.msra.mxu0 %v430
        %472 = vmatpush.msra.mxu0 %v429
        %473 = vmatpush.msra.mxu0 %v428
        %474 = vmatpush.msra.mxu0 %v427
        %475 = vmatmul.f32.gmra.mxu0 %v457
        %v476 = vpop.f32.mrf.mxu0
        %v477 = vadd.f32 0.0, %v476
        %478 = vdwg.mxu0
        %v479 = vsub.f32 %v417, %v477
        %v480 = vmul.f32 %v479, %v479
        %v482 = vsel %vm395, %v480, 0
        %484 = vmatpush.msra.mxu0 0.0
        %485 = vmatpush.msra.mxu0 0.0
        %486 = vmatpush.msra.mxu0 0.0
        %487 = vmatpush.msra.mxu0 0.0
        %488 = vmatpush.msra.mxu0 0.0
        %489 = vmatpush.msra.mxu0 0.0
        %490 = vmatpush.msra.mxu0 0.0
        %491 = vmatpush.msra.mxu0 0.0
        %492 = vmatpush.msra.mxu0 %v426
        %493 = vmatpush.msra.mxu0 %v425
        %494 = vmatpush.msra.mxu0 %v424
        %495 = vmatpush.msra.mxu0 %v423
        %496 = vmatpush.msra.mxu0 %v422
        %497 = vmatpush.msra.mxu0 %v421
        %498 = vmatpush.msra.mxu0 %v420
        %499 = vmatpush.msra.mxu0 %v419
        %500 = vmatmul.f32.gmra.mxu0 %v482
        %v501 = vpop.f32.mrf.mxu0
        %v502 = vadd.f32 0.0, %v501
        %503 = vdwg.mxu0
        %v504 = vmul.f32 %v502, 0.5
        %v506 = vsel %vm455, %v504, 0
        %508 = vmatpush.msra.mxu0 0.0
        %509 = vmatpush.msra.mxu0 0.0
        %510 = vmatpush.msra.mxu0 0.0
        %511 = vmatpush.msra.mxu0 0.0
        %512 = vmatpush.msra.mxu0 0.0
        %513 = vmatpush.msra.mxu0 0.0
        %514 = vmatpush.msra.mxu0 0.0
        %515 = vmatpush.msra.mxu0 0.0
        %516 = vmatpush.msra.mxu0 0.0
        %517 = vmatpush.msra.mxu0 0.0
        %518 = vmatpush.msra.mxu0 0.0
        %519 = vmatpush.msra.mxu0 0.0
        %520 = vmatpush.msra.mxu0 %v430
        %521 = vmatpush.msra.mxu0 %v429
        %522 = vmatpush.msra.mxu0 %v428
        %523 = vmatpush.msra.mxu0 %v427
        %524 = vmatmul.f32.gmra.mxu0 %v506
        %v525 = vpop.f32.mrf.mxu0
        %v526 = vadd.f32 1e-05, %v525
        %527 = vdwg.mxu0
        %v528 = vrsqrt.pop %v526
        %v529 = vmul.f32 %v528, %v526
        %v530 = vmul.f32 %v529, %v528
        %v531 = vmul.f32 0.5, %v530
        %v532 = vsub.f32 1.5, %v531
        %v533 = vmul.f32 %v528, %v532
        %vm534 = vweird.f32 %v526
        %vm535 = vweird.f32 %v528
        %vm536 = vmor %vm534, %vm535
        %v537 = vsel %vm536, %v528, %v533
        %v538 = vmul.f32 %v479, %v537
        %v539 = vld [vmem:[%s2] sm:$0x1]
        %v540 = vmul.f32 %v538, %v539
        %v541 = vld [vmem:[#allocation5] sm:$0x1]
        %v542 = vadd.f32 %v540, %v541
        %v543 = vxor.u32 %v542, 2147483648
        %v544 = vmul.f32 %v543, 1.442695
        %v545 = vpow.pop %v544
        %v546 = vadd.f32 %v545, 1.0
        %v547 = vrcp.pop %v546
        %v548 = vmul.f32 %v546, %v547
        %v549 = vsub.f32 1.0, %v548
        %v550 = vmul.f32 %v547, %v549
        %v551 = vadd.f32 %v547, %v550
        %vm552 = vweird.f32 %v546
        %vm553 = vweird.f32 %v547
        %vm554 = vmor %vm552, %vm553
        %v555 = vsel %vm554, %v547, %v551
        %v556 = vand.u32 2147483647, %v546
        %vm557 = vcmp.eq.f32.partialorder %v556, 8.507059e+37
        %v558 = vand.u32 %v546, 2147483648
        %v559 = vor.u32 1.1754944e-38, %v558
        %v560 = vsel %vm557, %v559, %v555
        %v561 = vmul.f32 1.0, %v560
        %v562 = vadd.f32 %v561, 1.0
        %v563 = vld [vmem:[#allocation7] sm:$0xff]
        %v564 = vld [vmem:[#allocation7 + $0x8] sm:$0xff]
        %v565 = vld [vmem:[#allocation7 + $0x10] sm:$0xff]
        %v566 = vld [vmem:[#allocation7 + $0x18] sm:$0xff]
        %v567 = vperm.slane %v562, 0
        %v568 = vmul.f32 %v563, %v567
        %v569 = vmul.f32 %v564, %v567
        %v570 = vmul.f32 %v565, %v567
        %v571 = vmul.f32 %v566, %v567
        %v573 = vsel %vm395, %v568, 0
        %v576 = vsel %vm395, %v569, 0
        %v579 = vsel %vm395, %v570, 0
        %v582 = vsel %vm395, %v571, 0
        %584 = vmatpush.msra.mxu0 0.0
        %585 = vmatpush.msra.mxu0 0.0
        %586 = vmatpush.msra.mxu0 0.0
        %587 = vmatpush.msra.mxu0 0.0
        %588 = vmatpush.msra.mxu0 0.0
        %589 = vmatpush.msra.mxu0 0.0
        %590 = vmatpush.msra.mxu0 0.0
        %591 = vmatpush.msra.mxu0 0.0
        %592 = vmatpush.msra.mxu0 %v344
        %593 = vmatpush.msra.mxu0 %v342
        %594 = vmatpush.msra.mxu0 %v340
        %595 = vmatpush.msra.mxu0 %v338
        %596 = vmatpush.msra.mxu0 %v336
        %597 = vmatpush.msra.mxu0 %v334
        %598 = vmatpush.msra.mxu0 %v332
        %599 = vmatpush.msra.mxu0 %v330
        %600 = vmatmul.f32.gmra.mxu0 %v573
        %v601 = vpop.f32.mrf.mxu0
        %v602 = vadd.f32 0.0, %v601
        %603 = vmatmul.f32.gmra.mxu0 %v576
        %v604 = vpop.f32.mrf.mxu0
        %v605 = vadd.f32 0.0, %v604
        %606 = vmatmul.f32.gmra.mxu0 %v579
        %v607 = vpop.f32.mrf.mxu0
        %v608 = vadd.f32 0.0, %v607
        %609 = vmatmul.f32.gmra.mxu0 %v582
        %v610 = vpop.f32.mrf.mxu0
        %v611 = vadd.f32 0.0, %v610
        %612 = vdwg.mxu0
        %613 = vmatpush.msra.mxu0 0.0
        %614 = vmatpush.msra.mxu0 0.0
        %615 = vmatpush.msra.mxu0 0.0
        %616 = vmatpush.msra.mxu0 0.0
        %617 = vmatpush.msra.mxu0 0.0
        %618 = vmatpush.msra.mxu0 0.0
        %619 = vmatpush.msra.mxu0 0.0
        %620 = vmatpush.msra.mxu0 0.0
        %621 = vmatpush.msra.mxu0 %v345
        %622 = vmatpush.msra.mxu0 %v343
        %623 = vmatpush.msra.mxu0 %v341
        %624 = vmatpush.msra.mxu0 %v339
        %625 = vmatpush.msra.mxu0 %v337
        %626 = vmatpush.msra.mxu0 %v335
        %627 = vmatpush.msra.mxu0 %v333
        %628 = vmatpush.msra.mxu0 %v331
        %629 = vmatmul.f32.gmra.mxu0 %v573
        %v630 = vpop.f32.mrf.mxu0
        %v631 = vadd.f32 0.0, %v630
        %632 = vmatmul.f32.gmra.mxu0 %v576
        %v633 = vpop.f32.mrf.mxu0
        %v634 = vadd.f32 0.0, %v633
        %635 = vmatmul.f32.gmra.mxu0 %v579
        %v636 = vpop.f32.mrf.mxu0
        %v637 = vadd.f32 0.0, %v636
        %638 = vmatmul.f32.gmra.mxu0 %v582
        %v639 = vpop.f32.mrf.mxu0
        %v640 = vadd.f32 0.0, %v639
        %641 = vdwg.mxu0
        %642 = vst [vmem:[%s329] sm:$0xff] %v602
        %643 = vst [vmem:[%s329 + $0x8] sm:$0xff] %v631
        %644 = vst [vmem:[%s329 + $0x10] sm:$0xff] %v605
        %645 = vst [vmem:[%s329 + $0x18] sm:$0xff] %v634
        %646 = vst [vmem:[%s329 + $0x20] sm:$0xff] %v608
        %647 = vst [vmem:[%s329 + $0x28] sm:$0xff] %v637
        %648 = vst [vmem:[%s329 + $0x30] sm:$0xff] %v611
        %649 = vst [vmem:[%s329 + $0x38] sm:$0xff] %v640
        %s650 = sand.u32 %s185, 1
        %s651 = scalar_lea.sflag [#allocation4], %s650
        %s652 = sand.u32 %s185, 1
        %s653 = smul.addr %s652, 64
        %s654 = scalar_lea.vmem [#allocation8], %s653
        // Predicated region
        $region61: #{tpu_custom_call.1} parent=47 // pred_check
          %p655 = pneg %p195
        $region62: #{tpu_custom_call.1} parent=47 // pred_check_branch
          %657 = sbr.rel (%p655) target = $region64
        $region63: #{tpu_custom_call.1} parent=47 // pred_region
          %659 = vsyncadd %s651, 0
          %s660 = smul.addr %s25, 8
          %s661 = smul.addr %s660, 8
          %s662 = scalar_lea.hbm %s7, %s661
          %s663 = sshll.u32 %s654, 4
          %s664 = int_to_ptr.vmem [resolvable:$true] %s663
          %s665 = sshll.u32 %s662, 4
          %s666 = int_to_ptr.hbm [resolvable:$true] %s665
          %671 = dma.vmem_to_hbm [thread:$0]  %s664, 1024, %s666, %s651, 256, 256, 16
        $region64: #{tpu_custom_call.1} parent=47 // pred_fallthru
          _
      $region48: #{tpu_custom_call.1} parent=5 // pred_fallthru
        _
      %p672 = scmp.le.s32.totalorder 2, %s20
      // Predicated region
      $region65: #{tpu_custom_call.1} parent=5 // pred_check
        %p673 = pneg %p672
      $region66: #{tpu_custom_call.1} parent=5 // pred_check_branch
        %675 = sbr.rel (%p673) target = $region68
      $region67: #{tpu_custom_call.1} parent=5 // pred_region
        %s676 = ssub.s32 %s20, 2
        // Predicated region
        $region69: #{tpu_custom_call.1} parent=67 // pred_check
          %p677 = pneg %p201
        $region70: #{tpu_custom_call.1} parent=67 // pred_check_branch
          %679 = sbr.rel (%p677) target = $region72
        $region71: #{tpu_custom_call.1} parent=67 // pred_region
          %s680 = sand.u32 %s186, 1
          %s681 = scalar_lea.sflag [#allocation4], %s680
          %s682 = sand.u32 %s186, 1
          %s683 = smul.addr %s682, 64
          %s684 = scalar_lea.vmem [#allocation8], %s683
          %686 = dma.done %s681, 1024
        $region72: #{tpu_custom_call.1} parent=67 // pred_fallthru
          _
      $region68: #{tpu_custom_call.1} parent=5 // pred_fallthru
        _
    $region6: #{tpu_custom_call.1} parent=1 // loop_footer
      %s24 = sadd.s32 1, %s20
    $region7: #{tpu_custom_call.1} parent=1 // loop_footer_branch
      %19 = sbr.rel target = $region3
    $region8: #{tpu_custom_call.1} parent=1 // loop_exit
      _
    %687 = vsyncpa [#allocation3], 1
    %s688 = scalar_lea.sflag [#allocation3], 1
    %689 = vsyncpa %s688, 1
    %690 = vsyncpa [#allocation6], 1
    %691 = vsyncpa [#allocation4], 1
    %s692 = scalar_lea.sflag [#allocation4], 1
    %693 = vsyncpa %s692, 1

</llo_original>
